<compile_context>
chip_gen: v7x
topology: tpu7x:2x2x1
jax: 0.10.0
libtpu: 0.0.40
codegen_flags: <defaults>
</compile_context>

<pallas_src>
import jax
import jax.numpy as jnp
from jax import lax
from jax.experimental import pallas as pl
from jax.experimental.pallas import tpu as pltpu

LAYER_NORM_EPS = 1e-5


def _layernorm_kernel(x_ref, w_ref, b_ref, o_ref):
    # x_ref: (TR, D) row tile; w_ref/b_ref: (1, D), broadcast over rows.
    x = x_ref[...].astype(jnp.float32)
    mean = jnp.mean(x, axis=-1, keepdims=True)
    xc = x - mean
    # Two-pass, population (unbiased=False) variance -- matches PyTorch.
    var = jnp.mean(xc * xc, axis=-1, keepdims=True)
    # Exact rsqrt (EUP slot) + multiply instead of sqrt + full-tile divide.
    inv = lax.rsqrt(var + LAYER_NORM_EPS)
    w = w_ref[...].astype(jnp.float32)  # (1, D)
    b = b_ref[...].astype(jnp.float32)  # (1, D)
    o_ref[...] = (xc * inv * w + b).astype(o_ref.dtype)


def layernorm(x, w, b, *, block_rows=512):
    """x: (B, S, D); w, b: (D,). Returns (B, S, D) in x.dtype."""
    B, S, D = x.shape
    rows = B * S
    x2 = x.reshape(rows, D)
    w2 = w.reshape(1, D)
    b2 = b.reshape(1, D)

    # Row tile: multiple of 8 (f32 sublane), or the full row count if smaller.
    tr = min(block_rows, rows)
    if tr != rows:
        tr = max(8, (tr // 8) * 8)
    grid = (pl.cdiv(rows, tr),)

    # VMEM budget: 2 double-buffered input tiles + 2 output tiles + params,
    # with headroom; capped at 64 MiB so the same sizing is safe on v7x.
    itemsize = jnp.dtype(x.dtype).itemsize
    tile_bytes = tr * D * itemsize
    vmem_limit = int(min(max(4 * tile_bytes + (4 << 20), 32 << 20), 64 << 20))

    out = pl.pallas_call(
        _layernorm_kernel,
        out_shape=jax.ShapeDtypeStruct((rows, D), x.dtype),
        grid=grid,
        in_specs=[
            pl.BlockSpec((tr, D), lambda i: (i, 0)),
            pl.BlockSpec((1, D), lambda i: (0, 0)),
            pl.BlockSpec((1, D), lambda i: (0, 0)),
        ],
        out_specs=pl.BlockSpec((tr, D), lambda i: (i, 0)),
        compiler_params=pltpu.CompilerParams(
            dimension_semantics=("parallel",),
            vmem_limit_bytes=vmem_limit,
        ),
    )(x2, w2, b2)
    return out.reshape(B, S, D)


def layernorm_ref(x, w, b):
    xf = x.astype(jnp.float32)
    e = jnp.mean(xf, axis=2, keepdims=True)
    s = jnp.sqrt(jnp.var(xf, axis=2, keepdims=True) + LAYER_NORM_EPS)
    return ((xf - e) / s * w + b).astype(x.dtype)


if __name__ == "__main__":
    key = jax.random.PRNGKey(0)
    batch, seq, d_model = 2, 8, 32

    x = jax.random.normal(key, (batch, seq, d_model), dtype=jnp.float32)
    # Params matching nn.Parameter(torch.ones(d_model) / torch.zeros(d_model)).
    w = jnp.ones((d_model,), dtype=jnp.float32)
    b = jnp.zeros((d_model,), dtype=jnp.float32)

    out = layernorm(x, w, b)
    out = jax.block_until_ready(out)

    ref = layernorm_ref(x, w, b)
    assert out.shape == (batch, seq, d_model)
    assert jnp.allclose(out, ref, atol=1e-5, rtol=1e-5)

    print("KERNEL_OK")
</pallas_src>

<mosaic_0001>
module attributes {stable_mosaic.version = 11 : i64} {
  func.func @_layernorm_kernel(%arg0: i32, %arg1: memref<16x32xf32, #tpu.memory_space<vmem>>, %arg2: memref<1x32xf32, #tpu.memory_space<vmem>>, %arg3: memref<1x32xf32, #tpu.memory_space<vmem>>, %arg4: memref<16x32xf32, #tpu.memory_space<vmem>>) attributes {dimension_semantics = [#tpu.dimension_semantics<parallel>], iteration_bounds = array<i64: 1>, scalar_prefetch = 0 : i64, scratch_operands = 0 : i64, tpu.core_type = #tpu.core_type<tc>, window_params = [{transform_indices = @transform_0, window_bounds = array<i64: 16, 32>}, {pipeline_mode = #tpu.pipeline_mode<synchronous>, transform_indices = @transform_1, window_bounds = array<i64: 1, 32>}, {pipeline_mode = #tpu.pipeline_mode<synchronous>, transform_indices = @transform_2, window_bounds = array<i64: 1, 32>}, {transform_indices = @transform_3, window_bounds = array<i64: 16, 32>}]} {
    %c0 = arith.constant 0 : index
    %c0_0 = arith.constant 0 : index
    %0 = vector.load %arg1[%c0, %c0_0] : memref<16x32xf32, #tpu.memory_space<vmem>>, vector<16x32xf32>
    %cst = arith.constant dense<0.000000e+00> : vector<16xf32>
    %1 = vector.multi_reduction <add>, %0, %cst [1] : vector<16x32xf32> to vector<16xf32>
    %2 = vector.shape_cast %1 : vector<16xf32> to vector<16x1xf32>
    %cst_1 = arith.constant 3.200000e+01 : f32
    %3 = vector.broadcast %cst_1 : f32 to vector<16x1xf32>
    %4 = arith.divf %2, %3 : vector<16x1xf32>
    %5 = vector.broadcast %4 : vector<16x1xf32> to vector<16x32xf32>
    %6 = arith.subf %0, %5 : vector<16x32xf32>
    %7 = arith.mulf %6, %6 : vector<16x32xf32>
    %cst_2 = arith.constant dense<0.000000e+00> : vector<16xf32>
    %8 = vector.multi_reduction <add>, %7, %cst_2 [1] : vector<16x32xf32> to vector<16xf32>
    %9 = vector.shape_cast %8 : vector<16xf32> to vector<16x1xf32>
    %cst_3 = arith.constant 3.200000e+01 : f32
    %10 = vector.broadcast %cst_3 : f32 to vector<16x1xf32>
    %11 = arith.divf %9, %10 : vector<16x1xf32>
    %cst_4 = arith.constant 9.99999974E-6 : f32
    %12 = vector.broadcast %cst_4 : f32 to vector<16x1xf32>
    %13 = arith.addf %11, %12 : vector<16x1xf32>
    %14 = math.rsqrt %13 : vector<16x1xf32>
    %c0_5 = arith.constant 0 : index
    %c0_6 = arith.constant 0 : index
    %15 = vector.load %arg2[%c0_5, %c0_6] : memref<1x32xf32, #tpu.memory_space<vmem>>, vector<1x32xf32>
    %c0_7 = arith.constant 0 : index
    %c0_8 = arith.constant 0 : index
    %16 = vector.load %arg3[%c0_7, %c0_8] : memref<1x32xf32, #tpu.memory_space<vmem>>, vector<1x32xf32>
    %17 = vector.broadcast %14 : vector<16x1xf32> to vector<16x32xf32>
    %18 = arith.mulf %6, %17 : vector<16x32xf32>
    %19 = vector.broadcast %15 : vector<1x32xf32> to vector<16x32xf32>
    %20 = arith.mulf %18, %19 : vector<16x32xf32>
    %21 = vector.broadcast %16 : vector<1x32xf32> to vector<16x32xf32>
    %22 = arith.addf %20, %21 : vector<16x32xf32>
    %c0_9 = arith.constant 0 : index
    %c0_10 = arith.constant 0 : index
    %23 = vector.load %arg4[%c0_9, %c0_10] : memref<16x32xf32, #tpu.memory_space<vmem>>, vector<16x32xf32>
    tpu.vector_store %arg4[%c0_9, %c0_10], %22 {strides = array<i32>} : memref<16x32xf32, #tpu.memory_space<vmem>>, vector<16x32xf32>,
    return
  }
  func.func @transform_0(%arg0: i32) -> (i32, i32) {
    %c0_i32 = arith.constant 0 : i32
    %c0_i32_0 = arith.constant 0 : i32
    return %arg0, %c0_i32 : i32, i32
  }
  func.func @transform_1(%arg0: i32) -> (i32, i32) {
    %c0_i32 = arith.constant 0 : i32
    %c0_i32_0 = arith.constant 0 : i32
    %c0_i32_1 = arith.constant 0 : i32
    return %c0_i32, %c0_i32_0 : i32, i32
  }
  func.func @transform_2(%arg0: i32) -> (i32, i32) {
    %c0_i32 = arith.constant 0 : i32
    %c0_i32_0 = arith.constant 0 : i32
    %c0_i32_1 = arith.constant 0 : i32
    return %c0_i32, %c0_i32_0 : i32, i32
  }
  func.func @transform_3(%arg0: i32) -> (i32, i32) {
    %c0_i32 = arith.constant 0 : i32
    %c0_i32_0 = arith.constant 0 : i32
    return %arg0, %c0_i32 : i32, i32
  }
}

</mosaic_0001>

<llo_original>
// kernel: tpu_custom_call.1
$region0: #{tpu_custom_call.1}
  #allocation0 [shape = 'u32[]', space=smem, size = 0x4, offset = 0x4, fixed_abs, tag = 'smem constant byte address 0x4 - core index']
  #allocation1 [shape = 'u32[144,128]{1,0:T(1,128)}', space=vmem, size = 0x12000, scoped, tag = 'internal scratch']
  %s0 = inlined_call_operand.hbm [shape: f32[16,32], index: 0, kind: input, shape index: {}]
  %s1 = inlined_call_operand.vmem [shape: f32[1,32], index: 1, kind: input, shape index: {}]
  %s2 = inlined_call_operand.vmem [shape: f32[1,32], index: 2, kind: input, shape index: {}]
  %s3 = inlined_call_operand.hbm [shape: f32[16,32], index: 3, kind: output, shape index: {}]
  %s4 = sld [smem:[#allocation0]]
  $region26: #{tpu_custom_call.1} parent=0
    _
  %s6 = ssub.s32 1, %s4
  %s7 = scalar_select 0, %s6, %s4
  $region1: #{tpu_custom_call.1} parent=0
    #allocation2 [shape = 'u8[8192]{0}', space=vmem, size = 0x2000, scoped, tag = 'input window, operand 0, single buffered']
    #allocation3 [shape = 's32[1]{0}', space=sflag, size = 0x4, scoped, tag = 'scoped memory for tpu_custom_call.1']
    #allocation4 [shape = 's32[1]{0}', space=sflag, size = 0x4, scoped, tag = 'scoped memory for tpu_custom_call.1']
    #allocation5 [shape = 'u8[8192]{0}', space=vmem, size = 0x2000, scoped, tag = 'output window, operand 0, single buffered']
    %8 = vsyncpa [#allocation3], 0
    %9 = vsyncpa [#allocation4], 0
    // Predicated region
    $region2: #{tpu_custom_call.1} parent=1 // pred_check
      _
    $region3: #{tpu_custom_call.1} parent=1 // pred_check_branch
      %11 = sbr.rel (0) target = $region5
    $region4: #{tpu_custom_call.1} parent=1 // pred_region
      %s13 = ssub.s32 256, 256
      %14 = vsyncadd [#allocation3], %s13
      %s15 = sshll.u32 [#allocation2], 4
      %s16 = int_to_ptr.vmem [resolvable:$true] %s15
      %21 = dma.hbm_to_vmem [thread:$0]  %s0, 256, %s16, [#allocation3], 128, 128, 8
    $region5: #{tpu_custom_call.1} parent=1 // pred_fallthru
      _
    // Predicated region
    $region6: #{tpu_custom_call.1} parent=1 // pred_check
      _
    $region7: #{tpu_custom_call.1} parent=1 // pred_check_branch
      %23 = sbr.rel (0) target = $region9
    $region8: #{tpu_custom_call.1} parent=1 // pred_region
      _
    $region9: #{tpu_custom_call.1} parent=1 // pred_fallthru
      _
    // Predicated region
    $region10: #{tpu_custom_call.1} parent=1 // pred_check
      _
    $region11: #{tpu_custom_call.1} parent=1 // pred_check_branch
      %25 = sbr.rel (0) target = $region13
    $region12: #{tpu_custom_call.1} parent=1 // pred_region
      _
    $region13: #{tpu_custom_call.1} parent=1 // pred_fallthru
      _
    // Predicated region
    $region14: #{tpu_custom_call.1} parent=1 // pred_check
      _
    $region15: #{tpu_custom_call.1} parent=1 // pred_check_branch
      %27 = sbr.rel (0) target = $region17
    $region16: #{tpu_custom_call.1} parent=1 // pred_region
      %28 = dma.done [#allocation3], 256
    $region17: #{tpu_custom_call.1} parent=1 // pred_fallthru
      _
    %v29 = vld [vmem:[#allocation2] sm:$0xff]
    %v30 = vld [vmem:[#allocation2 + $0x8] sm:$0xff]
    %vm31 = vcmask 261120
    %v32 = vsel %vm31, %v29, 0.0
    %33 = vadd.xlane.f32.xlu0 %v32
    %v34 = vpop.xlane.xlu0 %33
    %v35 = vsel %vm31, %v30, 0.0
    %36 = vadd.xlane.f32.xlu0 %v35
    %v37 = vpop.xlane.xlu0 %36
    %v38 = vrcp.pop 32.0
    %v39 = vmul.f32 %v34, %v38
    %v40 = vmul.f32 %v37, %v38
    %v41 = vsub.f32 %v29, %v39
    %v42 = vsub.f32 %v30, %v40
    %v43 = vmul.f32 %v41, %v41
    %v44 = vmul.f32 %v42, %v42
    %v45 = vsel %vm31, %v43, 0.0
    %46 = vadd.xlane.f32.xlu0 %v45
    %v47 = vpop.xlane.xlu0 %46
    %v48 = vsel %vm31, %v44, 0.0
    %49 = vadd.xlane.f32.xlu0 %v48
    %v50 = vpop.xlane.xlu0 %49
    %v51 = vmul.f32 %v47, %v38
    %v52 = vmul.f32 %v50, %v38
    %v53 = vadd.f32 %v51, 1e-05
    %v54 = vadd.f32 %v52, 1e-05
    %v55 = vrsqrt.pop %v53
    %v56 = vrsqrt.pop %v54
    %v57 = vld [vmem:[%s1] sm:$0x1]
    %v58 = vld [vmem:[%s2] sm:$0x1]
    %v59 = vmul.f32 %v41, %v55
    %v60 = vmul.f32 %v42, %v56
    %v62 = vlaneseq
    %v63 = vshrl.u32 %v62, 7
    %v64 = vsub.s32 0, %v63
    %v65 = vrot.slane %v57, %v64
    %v67 = vmul.f32 %v59, %v65
    %v68 = vmul.f32 %v60, %v65
    %v70 = vlaneseq
    %v71 = vshrl.u32 %v70, 7
    %v72 = vsub.s32 0, %v71
    %v73 = vrot.slane %v58, %v72
    %v75 = vadd.f32 %v67, %v73
    %v76 = vadd.f32 %v68, %v73
    %77 = vst.msk [vmem:[#allocation5] sm:$0xff] %vm31, %v75
    %78 = vst.msk [vmem:[#allocation5 + $0x8] sm:$0xff] %vm31, %v76
    // Predicated region
    $region18: #{tpu_custom_call.1} parent=1 // pred_check
      _
    $region19: #{tpu_custom_call.1} parent=1 // pred_check_branch
      %80 = sbr.rel (0) target = $region21
    $region20: #{tpu_custom_call.1} parent=1 // pred_region
      %s82 = ssub.s32 256, 256
      %83 = vsyncadd [#allocation4], %s82
      %s84 = sshll.u32 [#allocation5], 4
      %s85 = int_to_ptr.vmem [resolvable:$true] %s84
      %90 = dma.vmem_to_hbm [thread:$0]  %s85, 256, %s3, [#allocation4], 128, 128, 8
    $region21: #{tpu_custom_call.1} parent=1 // pred_fallthru
      _
    // Predicated region
    $region22: #{tpu_custom_call.1} parent=1 // pred_check
      _
    $region23: #{tpu_custom_call.1} parent=1 // pred_check_branch
      %92 = sbr.rel (0) target = $region25
    $region24: #{tpu_custom_call.1} parent=1 // pred_region
      %93 = dma.done [#allocation4], 256
    $region25: #{tpu_custom_call.1} parent=1 // pred_fallthru
      _
    %94 = vsyncpa [#allocation3], 1
    %95 = vsyncpa [#allocation4], 1

</llo_original>
